<compile_context>
chip_gen: v6e
topology: v6e:2x2x1
jax: 0.10.0
libtpu: 0.0.40
codegen_flags: <defaults>
</compile_context>

<pallas_src>
import functools

import jax
import jax.numpy as jnp
from jax.experimental import pallas as pl
from jax.experimental.pallas import tpu as pltpu

PAD = 128        # lane-dense padded width for every hidden layer
N_LAYERS = 4


def _round_up(a, m):
    return (a + m - 1) // m * m


def dqn_kernel(x_ref, w_ref, b_ref, o_ref, *, actions):
    """x_ref: (tile_b, state_dim) input dtype (f32)
       w_ref: (4, PAD, PAD)       compute dtype (zero-padded per-layer weights)
       b_ref: (4, 1, PAD)         f32          (zero-padded per-layer biases)
       o_ref: (tile_b, actions)   f32
    """
    cdt = w_ref.dtype
    x = x_ref[...].astype(cdt)                         # (tile_b, state_dim)
    state_dim = x.shape[1]
    # Zero-pad lanes in VMEM/vregs (padded weight rows are zero -> exact math).
    h = jnp.pad(x, ((0, 0), (0, PAD - state_dim)))     # (tile_b, PAD)
    # Three hidden layers: MXU matmul with f32 accumulation, f32 bias + ReLU.
    for i in range(N_LAYERS - 1):
        y = jnp.dot(h, w_ref[i], preferred_element_type=jnp.float32) + b_ref[i]
        h = jnp.maximum(y, 0.0).astype(cdt)
    # Output layer; tanh only on the real action lanes, store narrow block.
    y = jnp.dot(h, w_ref[N_LAYERS - 1],
                preferred_element_type=jnp.float32) + b_ref[N_LAYERS - 1]
    o_ref[...] = jnp.tanh(y[:, :actions])


def pack_params(params, compute_dtype=jnp.bfloat16):
    """Pack w1..w4 / b1..b4 into two lane-dense, zero-padded slabs.

    Call ONCE per parameter update (not per forward)."""
    w_slab = jnp.zeros((N_LAYERS, PAD, PAD), compute_dtype)
    b_slab = jnp.zeros((N_LAYERS, 1, PAD), jnp.float32)
    for i in range(N_LAYERS):
        w = params[f"w{i + 1}"]
        b = params[f"b{i + 1}"].reshape(1, -1)
        w_slab = w_slab.at[i, :w.shape[0], :w.shape[1]].set(w.astype(compute_dtype))
        b_slab = b_slab.at[i, :, :b.shape[1]].set(b.astype(jnp.float32))
    return w_slab, b_slab


def dqn_forward(x, w_slab, b_slab, *, actions, tile_b=1024):
    """x: (batch, state_dim) f32; w_slab/b_slab from pack_params()."""
    batch, state_dim = x.shape
    assert state_dim <= PAD

    # Sublane granule: 16 for bf16 (packed (16,128)), 8 for f32.
    granule = 16 if w_slab.dtype.itemsize == 2 else 8
    tile_b = max(granule, min(tile_b, _round_up(batch, granule)))
    tile_b = _round_up(tile_b, granule)
    b_pad = _round_up(batch, tile_b)
    if b_pad != batch:
        x = jnp.pad(x, ((0, b_pad - batch), (0, 0)))   # pad rows only

    grid = (b_pad // tile_b,)
    kernel = functools.partial(dqn_kernel, actions=actions)

    out = pl.pallas_call(
        kernel,
        out_shape=jax.ShapeDtypeStruct((b_pad, actions), jnp.float32),
        grid=grid,
        in_specs=[
            # x: tiled over batch; full (narrow) last dim, no lane padding.
            pl.BlockSpec((tile_b, state_dim), lambda i: (i, 0)),
            # weights / biases: constant block index -> VMEM-resident.
            pl.BlockSpec((N_LAYERS, PAD, PAD), lambda i: (0, 0, 0)),
            pl.BlockSpec((N_LAYERS, 1, PAD), lambda i: (0, 0, 0)),
        ],
        out_specs=pl.BlockSpec((tile_b, actions), lambda i: (i, 0)),
        compiler_params=pltpu.CompilerParams(
            dimension_semantics=("parallel",)),
    )(x, w_slab, b_slab)

    return out[:batch]


def init_params(key, state_dim, actions):
    """Deterministic init mimicking PyTorch Linear default (uniform +-1/sqrt(fan_in))."""
    sizes = [(state_dim, 64), (64, 128), (128, 16), (16, actions)]
    params = {}
    for i, (fan_in, fan_out) in enumerate(sizes, start=1):
        key, kw, kb = jax.random.split(key, 3)
        bound = 1.0 / jnp.sqrt(fan_in)
        params[f"w{i}"] = jax.random.uniform(
            kw, (fan_in, fan_out), jnp.float32, -bound, bound)
        params[f"b{i}"] = jax.random.uniform(
            kb, (1, fan_out), jnp.float32, -bound, bound)
    return params


def reference_forward(x, params):
    h = jnp.maximum(x @ params["w1"] + params["b1"], 0.0)
    h = jnp.maximum(h @ params["w2"] + params["b2"], 0.0)
    h = jnp.maximum(h @ params["w3"] + params["b3"], 0.0)
    return jnp.tanh(h @ params["w4"] + params["b4"])


if __name__ == "__main__":
    key = jax.random.PRNGKey(0)
    state_dim = 8    # 8-directional observation
    actions = 4

    key, kp = jax.random.split(key)
    params = init_params(kp, state_dim, actions)

    # Pack parameter slabs ONCE (hoisted out of the forward path).
    w32, b32 = pack_params(params, jnp.float32)
    wbf, bbf = pack_params(params, jnp.bfloat16)

    fwd = jax.jit(dqn_forward, static_argnames=("actions", "tile_b"))

    # 1) Single-env-step style small batch, f32 (exact check).
    key, kx = jax.random.split(key)
    x_small = jax.random.normal(kx, (2, state_dim), jnp.float32)
    out_small = jax.block_until_ready(
        fwd(x_small, w32, b32, actions=actions, tile_b=1024))
    ref_small = reference_forward(x_small, params)
    assert out_small.shape == (2, actions)
    assert jnp.allclose(out_small, ref_small, atol=1e-5, rtol=1e-5), \
        "f32 small-batch mismatch vs reference"

    # 2) Module's replay batchSize=64, f32.
    key, kb = jax.random.split(key)
    x_rb = jax.random.normal(kb, (64, state_dim), jnp.float32)
    out_rb = jax.block_until_ready(
        fwd(x_rb, w32, b32, actions=actions, tile_b=1024))
    ref_rb = reference_forward(x_rb, params)
    assert out_rb.shape == (64, actions)
    assert jnp.allclose(out_rb, ref_rb, atol=1e-5, rtol=1e-5), \
        "f32 batched mismatch vs reference"

    # 3) Large batch, default bf16 compute (MXU fast path, f32 accumulation);
    #    tile_b=1024 -> 2 grid steps (exercises megacore sharding on v7x).
    key, kg = jax.random.split(key)
    x_big = jax.random.normal(kg, (2048, state_dim), jnp.float32)
    out_big = jax.block_until_ready(
        fwd(x_big, wbf, bbf, actions=actions, tile_b=1024))
    ref_big = reference_forward(x_big, params)
    assert out_big.shape == (2048, actions)
    assert jnp.allclose(out_big, ref_big, atol=5e-2, rtol=5e-2), \
        "bf16 batched mismatch vs reference"

    # TODO(synk): replay-memory sampling / RMSprop optimize() / epsilon-greedy
    # action selection are host-side RL bookkeeping, not part of the forward
    # pass, and are not implemented as kernels.
    print("KERNEL_OK")
</pallas_src>

<mosaic_0001>
module attributes {stable_mosaic.version = 11 : i64} {
  func.func @dqn_kernel(%arg0: i32, %arg1: memref<8x8xf32, #tpu.memory_space<vmem>>, %arg2: memref<4x128x128xf32, #tpu.memory_space<vmem>>, %arg3: memref<4x1x128xf32, #tpu.memory_space<vmem>>, %arg4: memref<8x4xf32, #tpu.memory_space<vmem>>) attributes {dimension_semantics = [#tpu.dimension_semantics<parallel>], iteration_bounds = array<i64: 1>, scalar_prefetch = 0 : i64, scratch_operands = 0 : i64, tpu.core_type = #tpu.core_type<tc>, window_params = [{transform_indices = @transform_0, window_bounds = array<i64: 8, 8>}, {pipeline_mode = #tpu.pipeline_mode<synchronous>, transform_indices = @transform_1, window_bounds = array<i64: 4, 128, 128>}, {pipeline_mode = #tpu.pipeline_mode<synchronous>, transform_indices = @transform_2, window_bounds = array<i64: 4, 1, 128>}, {transform_indices = @transform_3, window_bounds = array<i64: 8, 4>}]} {
    %c0 = arith.constant 0 : index
    %c0_0 = arith.constant 0 : index
    %0 = vector.load %arg1[%c0, %c0_0] : memref<8x8xf32, #tpu.memory_space<vmem>>, vector<8x8xf32>
    %c0_i32 = arith.constant 0 : i32
    %1 = arith.sitofp %c0_i32 : i32 to f32
    %2 = vector.broadcast %1 : f32 to vector<8x120xf32>
    %3 = tpu.concatenate %0, %2 in 1 : vector<8x8xf32>, vector<8x120xf32> -> vector<8x128xf32>
    %c0_1 = arith.constant 0 : index
    %c0_2 = arith.constant 0 : index
    %c0_3 = arith.constant 0 : index
    %4 = vector.load %arg2[%c0_1, %c0_2, %c0_3] : memref<4x128x128xf32, #tpu.memory_space<vmem>>, vector<1x128x128xf32>
    %5 = vector.shape_cast %4 : vector<1x128x128xf32> to vector<128x128xf32>
    %cst = arith.constant dense<0.000000e+00> : vector<8x128xf32>
    %6 = tpu.matmul %3, %5, %cst {dimension_numbers = #tpu.dot_dimension_numbers<[1], [0], [0], [1], [0, 0, 1, 1], [], []>} : vector<8x128xf32>, vector<128x128xf32>, vector<8x128xf32> -> vector<8x128xf32>
    %c0_4 = arith.constant 0 : index
    %c0_5 = arith.constant 0 : index
    %c0_6 = arith.constant 0 : index
    %7 = vector.load %arg3[%c0_4, %c0_5, %c0_6] : memref<4x1x128xf32, #tpu.memory_space<vmem>>, vector<1x1x128xf32>
    %8 = vector.shape_cast %7 : vector<1x1x128xf32> to vector<1x128xf32>
    %9 = vector.broadcast %8 : vector<1x128xf32> to vector<8x128xf32>
    %10 = arith.addf %6, %9 : vector<8x128xf32>
    %cst_7 = arith.constant 0.000000e+00 : f32
    %11 = vector.broadcast %cst_7 : f32 to vector<8x128xf32>
    %12 = arith.maximumf %10, %11 : vector<8x128xf32>
    %c1 = arith.constant 1 : index
    %c0_8 = arith.constant 0 : index
    %c0_9 = arith.constant 0 : index
    %13 = vector.load %arg2[%c1, %c0_8, %c0_9] : memref<4x128x128xf32, #tpu.memory_space<vmem>>, vector<1x128x128xf32>
    %14 = vector.shape_cast %13 : vector<1x128x128xf32> to vector<128x128xf32>
    %cst_10 = arith.constant dense<0.000000e+00> : vector<8x128xf32>
    %15 = tpu.matmul %12, %14, %cst_10 {dimension_numbers = #tpu.dot_dimension_numbers<[1], [0], [0], [1], [0, 0, 1, 1], [], []>} : vector<8x128xf32>, vector<128x128xf32>, vector<8x128xf32> -> vector<8x128xf32>
    %c1_11 = arith.constant 1 : index
    %c0_12 = arith.constant 0 : index
    %c0_13 = arith.constant 0 : index
    %16 = vector.load %arg3[%c1_11, %c0_12, %c0_13] : memref<4x1x128xf32, #tpu.memory_space<vmem>>, vector<1x1x128xf32>
    %17 = vector.shape_cast %16 : vector<1x1x128xf32> to vector<1x128xf32>
    %18 = vector.broadcast %17 : vector<1x128xf32> to vector<8x128xf32>
    %19 = arith.addf %15, %18 : vector<8x128xf32>
    %cst_14 = arith.constant 0.000000e+00 : f32
    %20 = vector.broadcast %cst_14 : f32 to vector<8x128xf32>
    %21 = arith.maximumf %19, %20 : vector<8x128xf32>
    %c2 = arith.constant 2 : index
    %c0_15 = arith.constant 0 : index
    %c0_16 = arith.constant 0 : index
    %22 = vector.load %arg2[%c2, %c0_15, %c0_16] : memref<4x128x128xf32, #tpu.memory_space<vmem>>, vector<1x128x128xf32>
    %23 = vector.shape_cast %22 : vector<1x128x128xf32> to vector<128x128xf32>
    %cst_17 = arith.constant dense<0.000000e+00> : vector<8x128xf32>
    %24 = tpu.matmul %21, %23, %cst_17 {dimension_numbers = #tpu.dot_dimension_numbers<[1], [0], [0], [1], [0, 0, 1, 1], [], []>} : vector<8x128xf32>, vector<128x128xf32>, vector<8x128xf32> -> vector<8x128xf32>
    %c2_18 = arith.constant 2 : index
    %c0_19 = arith.constant 0 : index
    %c0_20 = arith.constant 0 : index
    %25 = vector.load %arg3[%c2_18, %c0_19, %c0_20] : memref<4x1x128xf32, #tpu.memory_space<vmem>>, vector<1x1x128xf32>
    %26 = vector.shape_cast %25 : vector<1x1x128xf32> to vector<1x128xf32>
    %27 = vector.broadcast %26 : vector<1x128xf32> to vector<8x128xf32>
    %28 = arith.addf %24, %27 : vector<8x128xf32>
    %cst_21 = arith.constant 0.000000e+00 : f32
    %29 = vector.broadcast %cst_21 : f32 to vector<8x128xf32>
    %30 = arith.maximumf %28, %29 : vector<8x128xf32>
    %c3 = arith.constant 3 : index
    %c0_22 = arith.constant 0 : index
    %c0_23 = arith.constant 0 : index
    %31 = vector.load %arg2[%c3, %c0_22, %c0_23] : memref<4x128x128xf32, #tpu.memory_space<vmem>>, vector<1x128x128xf32>
    %32 = vector.shape_cast %31 : vector<1x128x128xf32> to vector<128x128xf32>
    %cst_24 = arith.constant dense<0.000000e+00> : vector<8x128xf32>
    %33 = tpu.matmul %30, %32, %cst_24 {dimension_numbers = #tpu.dot_dimension_numbers<[1], [0], [0], [1], [0, 0, 1, 1], [], []>} : vector<8x128xf32>, vector<128x128xf32>, vector<8x128xf32> -> vector<8x128xf32>
    %c3_25 = arith.constant 3 : index
    %c0_26 = arith.constant 0 : index
    %c0_27 = arith.constant 0 : index
    %34 = vector.load %arg3[%c3_25, %c0_26, %c0_27] : memref<4x1x128xf32, #tpu.memory_space<vmem>>, vector<1x1x128xf32>
    %35 = vector.shape_cast %34 : vector<1x1x128xf32> to vector<1x128xf32>
    %36 = vector.broadcast %35 : vector<1x128xf32> to vector<8x128xf32>
    %37 = arith.addf %33, %36 : vector<8x128xf32>
    %38 = vector.extract_strided_slice %37 {offsets = [0, 0], sizes = [8, 4], strides = [1, 1]} : vector<8x128xf32> to vector<8x4xf32>
    %39 = math.tanh %38 : vector<8x4xf32>
    %c0_28 = arith.constant 0 : index
    %c0_29 = arith.constant 0 : index
    %40 = vector.load %arg4[%c0_28, %c0_29] : memref<8x4xf32, #tpu.memory_space<vmem>>, vector<8x4xf32>
    tpu.vector_store %arg4[%c0_28, %c0_29], %39 {strides = array<i32>} : memref<8x4xf32, #tpu.memory_space<vmem>>, vector<8x4xf32>,
    return
  }
  func.func @transform_0(%arg0: i32) -> (i32, i32) {
    %c0_i32 = arith.constant 0 : i32
    %c0_i32_0 = arith.constant 0 : i32
    return %arg0, %c0_i32 : i32, i32
  }
  func.func @transform_1(%arg0: i32) -> (i32, i32, i32) {
    %c0_i32 = arith.constant 0 : i32
    %c0_i32_0 = arith.constant 0 : i32
    %c0_i32_1 = arith.constant 0 : i32
    %c0_i32_2 = arith.constant 0 : i32
    return %c0_i32, %c0_i32_0, %c0_i32_1 : i32, i32, i32
  }
  func.func @transform_2(%arg0: i32) -> (i32, i32, i32) {
    %c0_i32 = arith.constant 0 : i32
    %c0_i32_0 = arith.constant 0 : i32
    %c0_i32_1 = arith.constant 0 : i32
    %c0_i32_2 = arith.constant 0 : i32
    return %c0_i32, %c0_i32_0, %c0_i32_1 : i32, i32, i32
  }
  func.func @transform_3(%arg0: i32) -> (i32, i32) {
    %c0_i32 = arith.constant 0 : i32
    %c0_i32_0 = arith.constant 0 : i32
    return %arg0, %c0_i32 : i32, i32
  }
}

</mosaic_0001>

<llo_original>
// kernel: dqn_forward.1
$region0: #{dqn_forward.1}
  #allocation0 [shape = 'u32[]', space=smem, size = 0x4, offset = 0x4, fixed_abs, tag = 'smem constant byte address 0x4 - core index']
  #allocation1 [shape = 'u32[144,128]{1,0:T(1,128)}', space=vmem, size = 0x12000, scoped, tag = 'internal scratch']
  %s0 = inlined_call_operand.vmem [shape: f32[8,8], index: 0, kind: input, shape index: {}]
  %s1 = inlined_call_operand.hbm [shape: f32[4,128,128], index: 1, kind: input, shape index: {}]
  %s2 = inlined_call_operand.vmem [shape: f32[4,1,128], index: 2, kind: input, shape index: {}]
  %s3 = inlined_call_operand.vmem [shape: f32[8,4], index: 3, kind: output, shape index: {}]
  %s4 = sld [smem:[#allocation0]]
  $region26: #{dqn_forward.1} parent=0
    _
  %s6 = ssub.s32 1, %s4
  %s7 = scalar_select 0, %s6, %s4
  $region1: #{dqn_forward.1} parent=0
    #allocation2 [shape = 'u8[262144]{0}', space=vmem, size = 0x40000, scoped, tag = 'input window, operand 1, single buffered']
    #allocation3 [shape = 's32[1]{0}', space=sflag, size = 0x4, scoped, tag = 'scoped memory for dqn_forward.1']
    %8 = vsyncpa [#allocation3], 0
    // Predicated region
    $region2: #{dqn_forward.1} parent=1 // pred_check
      _
    $region3: #{dqn_forward.1} parent=1 // pred_check_branch
      %10 = sbr.rel (0) target = $region5
    $region4: #{dqn_forward.1} parent=1 // pred_region
      _
    $region5: #{dqn_forward.1} parent=1 // pred_fallthru
      _
    // Predicated region
    $region6: #{dqn_forward.1} parent=1 // pred_check
      _
    $region7: #{dqn_forward.1} parent=1 // pred_check_branch
      %12 = sbr.rel (0) target = $region9
    $region8: #{dqn_forward.1} parent=1 // pred_region
      %s14 = ssub.s32 8192, 8192
      %15 = vsyncadd [#allocation3], %s14
      %s16 = sshll.u32 [#allocation2], 4
      %s17 = int_to_ptr.vmem [resolvable:$true] %s16
      %22 = dma.hbm_to_vmem [thread:$0]  %s1, 8192, %s17, [#allocation3], 128, 128, 8
    $region9: #{dqn_forward.1} parent=1 // pred_fallthru
      _
    // Predicated region
    $region10: #{dqn_forward.1} parent=1 // pred_check
      _
    $region11: #{dqn_forward.1} parent=1 // pred_check_branch
      %24 = sbr.rel (0) target = $region13
    $region12: #{dqn_forward.1} parent=1 // pred_region
      _
    $region13: #{dqn_forward.1} parent=1 // pred_fallthru
      _
    // Predicated region
    $region14: #{dqn_forward.1} parent=1 // pred_check
      _
    $region15: #{dqn_forward.1} parent=1 // pred_check_branch
      %26 = sbr.rel (0) target = $region17
    $region16: #{dqn_forward.1} parent=1 // pred_region
      %27 = dma.done [#allocation3], 8192
    $region17: #{dqn_forward.1} parent=1 // pred_fallthru
      _
    %v28 = vld [vmem:[%s0] sm:$0xff]
    %vm29 = vcmask 64512
    %v30 = vsel %vm29, %v28, 0.0
    %v31 = vld [vmem:[#allocation2] sm:$0xff]
    %v32 = vld [vmem:[#allocation2 + $0x8] sm:$0xff]
    %v33 = vld [vmem:[#allocation2 + $0x10] sm:$0xff]
    %v34 = vld [vmem:[#allocation2 + $0x18] sm:$0xff]
    %v35 = vld [vmem:[#allocation2 + $0x20] sm:$0xff]
    %v36 = vld [vmem:[#allocation2 + $0x28] sm:$0xff]
    %v37 = vld [vmem:[#allocation2 + $0x30] sm:$0xff]
    %v38 = vld [vmem:[#allocation2 + $0x38] sm:$0xff]
    %v39 = vld [vmem:[#allocation2 + $0x40] sm:$0xff]
    %v40 = vld [vmem:[#allocation2 + $0x48] sm:$0xff]
    %v41 = vld [vmem:[#allocation2 + $0x50] sm:$0xff]
    %v42 = vld [vmem:[#allocation2 + $0x58] sm:$0xff]
    %v43 = vld [vmem:[#allocation2 + $0x60] sm:$0xff]
    %v44 = vld [vmem:[#allocation2 + $0x68] sm:$0xff]
    %v45 = vld [vmem:[#allocation2 + $0x70] sm:$0xff]
    %v46 = vld [vmem:[#allocation2 + $0x78] sm:$0xff]
    %v47 = vld [vmem:[%s2] sm:$0x1]
    %v49 = vlaneseq
    %v50 = vshrl.u32 %v49, 7
    %v51 = vsub.s32 0, %v50
    %v52 = vrot.slane %v47, %v51
    %54 = vmatprep.subr.mxu0 0.0
    %55 = vmatpush1.msra.mxu0 %v46
    %56 = vmatprep.subr.mxu0 0.0
    %57 = vmatpush1.msra.mxu0 %v45
    %58 = vmatprep.subr.mxu0 0.0
    %59 = vmatpush1.msra.mxu0 %v44
    %60 = vmatprep.subr.mxu0 0.0
    %61 = vmatpush1.msra.mxu0 %v43
    %62 = vmatprep.subr.mxu0 0.0
    %63 = vmatpush1.msra.mxu0 %v42
    %64 = vmatprep.subr.mxu0 0.0
    %65 = vmatpush1.msra.mxu0 %v41
    %66 = vmatprep.subr.mxu0 0.0
    %67 = vmatpush1.msra.mxu0 %v40
    %68 = vmatprep.subr.mxu0 0.0
    %69 = vmatpush1.msra.mxu0 %v39
    %70 = vmatprep.subr.mxu0 0.0
    %71 = vmatpush1.msra.mxu0 %v38
    %72 = vmatprep.subr.mxu0 0.0
    %73 = vmatpush1.msra.mxu0 %v37
    %74 = vmatprep.subr.mxu0 0.0
    %75 = vmatpush1.msra.mxu0 %v36
    %76 = vmatprep.subr.mxu0 0.0
    %77 = vmatpush1.msra.mxu0 %v35
    %78 = vmatprep.subr.mxu0 0.0
    %79 = vmatpush1.msra.mxu0 %v34
    %80 = vmatprep.subr.mxu0 0.0
    %81 = vmatpush1.msra.mxu0 %v33
    %82 = vmatprep.subr.mxu0 0.0
    %83 = vmatpush1.msra.mxu0 %v32
    %84 = vmatprep.subr.mxu0 0.0
    %85 = vmatpush1.msra.mxu0 %v31
    %86 = vmatprep.subr.mxu0 0.0
    %87 = vmatpush2.msra.mxu0 0.0
    %88 = vmatprep.subr.mxu0 0.0
    %89 = vmatpush2.msra.mxu0 0.0
    %90 = vmatprep.subr.mxu0 0.0
    %91 = vmatpush2.msra.mxu0 0.0
    %92 = vmatprep.subr.mxu0 0.0
    %93 = vmatpush2.msra.mxu0 0.0
    %94 = vmatprep.subr.mxu0 0.0
    %95 = vmatpush2.msra.mxu0 0.0
    %96 = vmatprep.subr.mxu0 0.0
    %97 = vmatpush2.msra.mxu0 0.0
    %98 = vmatprep.subr.mxu0 0.0
    %99 = vmatpush2.msra.mxu0 0.0
    %100 = vmatprep.subr.mxu0 0.0
    %101 = vmatpush2.msra.mxu0 0.0
    %102 = vmatprep.subr.mxu0 0.0
    %103 = vmatpush2.msra.mxu0 0.0
    %104 = vmatprep.subr.mxu0 0.0
    %105 = vmatpush2.msra.mxu0 0.0
    %106 = vmatprep.subr.mxu0 0.0
    %107 = vmatpush2.msra.mxu0 0.0
    %108 = vmatprep.subr.mxu0 0.0
    %109 = vmatpush2.msra.mxu0 0.0
    %110 = vmatprep.subr.mxu0 0.0
    %111 = vmatpush2.msra.mxu0 0.0
    %112 = vmatprep.subr.mxu0 0.0
    %113 = vmatpush2.msra.mxu0 0.0
    %114 = vmatprep.subr.mxu0 0.0
    %115 = vmatpush2.msra.mxu0 0.0
    %116 = vmatprep.subr.mxu0 0.0
    %117 = vmatpush2.msra.mxu0 0.0
    %118 = vmatprep.mubr.f32.mxu0 0.0
    %119 = vmatmul.mubr.f32.gmra.mxu0 %v30
    %v120 = vpop.f32.mrf.mxu0
    %v121 = vadd.f32 %v52, %v120
    %v122 = vpop.f32.mrf.mxu0
    %123 = vdwg.mxu0
    %v124 = vmax.f32 %v121, 0.0
    %s125 = scalar_lea.vmem [#allocation2], 128
    %v126 = vld [vmem:[%s125] sm:$0xff]
    %v127 = vld [vmem:[%s125 + $0x8] sm:$0xff]
    %v128 = vld [vmem:[%s125 + $0x10] sm:$0xff]
    %v129 = vld [vmem:[%s125 + $0x18] sm:$0xff]
    %v130 = vld [vmem:[%s125 + $0x20] sm:$0xff]
    %v131 = vld [vmem:[%s125 + $0x28] sm:$0xff]
    %v132 = vld [vmem:[%s125 + $0x30] sm:$0xff]
    %v133 = vld [vmem:[%s125 + $0x38] sm:$0xff]
    %v134 = vld [vmem:[%s125 + $0x40] sm:$0xff]
    %v135 = vld [vmem:[%s125 + $0x48] sm:$0xff]
    %v136 = vld [vmem:[%s125 + $0x50] sm:$0xff]
    %v137 = vld [vmem:[%s125 + $0x58] sm:$0xff]
    %v138 = vld [vmem:[%s125 + $0x60] sm:$0xff]
    %v139 = vld [vmem:[%s125 + $0x68] sm:$0xff]
    %v140 = vld [vmem:[%s125 + $0x70] sm:$0xff]
    %v141 = vld [vmem:[%s125 + $0x78] sm:$0xff]
    %s142 = scalar_lea.vmem %s2, 1
    %v143 = vld [vmem:[%s142] sm:$0x1]
    %v145 = vlaneseq
    %v146 = vshrl.u32 %v145, 7
    %v147 = vsub.s32 0, %v146
    %v148 = vrot.slane %v143, %v147
    %150 = vmatprep.subr.mxu0 0.0
    %151 = vmatpush1.msra.mxu0 %v141
    %152 = vmatprep.subr.mxu0 0.0
    %153 = vmatpush1.msra.mxu0 %v140
    %154 = vmatprep.subr.mxu0 0.0
    %155 = vmatpush1.msra.mxu0 %v139
    %156 = vmatprep.subr.mxu0 0.0
    %157 = vmatpush1.msra.mxu0 %v138
    %158 = vmatprep.subr.mxu0 0.0
    %159 = vmatpush1.msra.mxu0 %v137
    %160 = vmatprep.subr.mxu0 0.0
    %161 = vmatpush1.msra.mxu0 %v136
    %162 = vmatprep.subr.mxu0 0.0
    %163 = vmatpush1.msra.mxu0 %v135
    %164 = vmatprep.subr.mxu0 0.0
    %165 = vmatpush1.msra.mxu0 %v134
    %166 = vmatprep.subr.mxu0 0.0
    %167 = vmatpush1.msra.mxu0 %v133
    %168 = vmatprep.subr.mxu0 0.0
    %169 = vmatpush1.msra.mxu0 %v132
    %170 = vmatprep.subr.mxu0 0.0
    %171 = vmatpush1.msra.mxu0 %v131
    %172 = vmatprep.subr.mxu0 0.0
    %173 = vmatpush1.msra.mxu0 %v130
    %174 = vmatprep.subr.mxu0 0.0
    %175 = vmatpush1.msra.mxu0 %v129
    %176 = vmatprep.subr.mxu0 0.0
    %177 = vmatpush1.msra.mxu0 %v128
    %178 = vmatprep.subr.mxu0 0.0
    %179 = vmatpush1.msra.mxu0 %v127
    %180 = vmatprep.subr.mxu0 0.0
    %181 = vmatpush1.msra.mxu0 %v126
    %182 = vmatprep.subr.mxu0 0.0
    %183 = vmatpush2.msra.mxu0 0.0
    %184 = vmatprep.subr.mxu0 0.0
    %185 = vmatpush2.msra.mxu0 0.0
    %186 = vmatprep.subr.mxu0 0.0
    %187 = vmatpush2.msra.mxu0 0.0
    %188 = vmatprep.subr.mxu0 0.0
    %189 = vmatpush2.msra.mxu0 0.0
    %190 = vmatprep.subr.mxu0 0.0
    %191 = vmatpush2.msra.mxu0 0.0
    %192 = vmatprep.subr.mxu0 0.0
    %193 = vmatpush2.msra.mxu0 0.0
    %194 = vmatprep.subr.mxu0 0.0
    %195 = vmatpush2.msra.mxu0 0.0
    %196 = vmatprep.subr.mxu0 0.0
    %197 = vmatpush2.msra.mxu0 0.0
    %198 = vmatprep.subr.mxu0 0.0
    %199 = vmatpush2.msra.mxu0 0.0
    %200 = vmatprep.subr.mxu0 0.0
    %201 = vmatpush2.msra.mxu0 0.0
    %202 = vmatprep.subr.mxu0 0.0
    %203 = vmatpush2.msra.mxu0 0.0
    %204 = vmatprep.subr.mxu0 0.0
    %205 = vmatpush2.msra.mxu0 0.0
    %206 = vmatprep.subr.mxu0 0.0
    %207 = vmatpush2.msra.mxu0 0.0
    %208 = vmatprep.subr.mxu0 0.0
    %209 = vmatpush2.msra.mxu0 0.0
    %210 = vmatprep.subr.mxu0 0.0
    %211 = vmatpush2.msra.mxu0 0.0
    %212 = vmatprep.subr.mxu0 0.0
    %213 = vmatpush2.msra.mxu0 0.0
    %214 = vmatprep.mubr.f32.mxu0 0.0
    %215 = vmatmul.mubr.f32.gmra.mxu0 %v124
    %v216 = vpop.f32.mrf.mxu0
    %v217 = vadd.f32 %v148, %v216
    %v218 = vpop.f32.mrf.mxu0
    %219 = vdwg.mxu0
    %v220 = vmax.f32 %v217, 0.0
    %s221 = scalar_lea.vmem [#allocation2], 256
    %v222 = vld [vmem:[%s221] sm:$0xff]
    %v223 = vld [vmem:[%s221 + $0x8] sm:$0xff]
    %v224 = vld [vmem:[%s221 + $0x10] sm:$0xff]
    %v225 = vld [vmem:[%s221 + $0x18] sm:$0xff]
    %v226 = vld [vmem:[%s221 + $0x20] sm:$0xff]
    %v227 = vld [vmem:[%s221 + $0x28] sm:$0xff]
    %v228 = vld [vmem:[%s221 + $0x30] sm:$0xff]
    %v229 = vld [vmem:[%s221 + $0x38] sm:$0xff]
    %v230 = vld [vmem:[%s221 + $0x40] sm:$0xff]
    %v231 = vld [vmem:[%s221 + $0x48] sm:$0xff]
    %v232 = vld [vmem:[%s221 + $0x50] sm:$0xff]
    %v233 = vld [vmem:[%s221 + $0x58] sm:$0xff]
    %v234 = vld [vmem:[%s221 + $0x60] sm:$0xff]
    %v235 = vld [vmem:[%s221 + $0x68] sm:$0xff]
    %v236 = vld [vmem:[%s221 + $0x70] sm:$0xff]
    %v237 = vld [vmem:[%s221 + $0x78] sm:$0xff]
    %s238 = scalar_lea.vmem %s2, 2
    %v239 = vld [vmem:[%s238] sm:$0x1]
    %v241 = vlaneseq
    %v242 = vshrl.u32 %v241, 7
    %v243 = vsub.s32 0, %v242
    %v244 = vrot.slane %v239, %v243
    %246 = vmatprep.subr.mxu0 0.0
    %247 = vmatpush1.msra.mxu0 %v237
    %248 = vmatprep.subr.mxu0 0.0
    %249 = vmatpush1.msra.mxu0 %v236
    %250 = vmatprep.subr.mxu0 0.0
    %251 = vmatpush1.msra.mxu0 %v235
    %252 = vmatprep.subr.mxu0 0.0
    %253 = vmatpush1.msra.mxu0 %v234
    %254 = vmatprep.subr.mxu0 0.0
    %255 = vmatpush1.msra.mxu0 %v233
    %256 = vmatprep.subr.mxu0 0.0
    %257 = vmatpush1.msra.mxu0 %v232
    %258 = vmatprep.subr.mxu0 0.0
    %259 = vmatpush1.msra.mxu0 %v231
    %260 = vmatprep.subr.mxu0 0.0
    %261 = vmatpush1.msra.mxu0 %v230
    %262 = vmatprep.subr.mxu0 0.0
    %263 = vmatpush1.msra.mxu0 %v229
    %264 = vmatprep.subr.mxu0 0.0
    %265 = vmatpush1.msra.mxu0 %v228
    %266 = vmatprep.subr.mxu0 0.0
    %267 = vmatpush1.msra.mxu0 %v227
    %268 = vmatprep.subr.mxu0 0.0
    %269 = vmatpush1.msra.mxu0 %v226
    %270 = vmatprep.subr.mxu0 0.0
    %271 = vmatpush1.msra.mxu0 %v225
    %272 = vmatprep.subr.mxu0 0.0
    %273 = vmatpush1.msra.mxu0 %v224
    %274 = vmatprep.subr.mxu0 0.0
    %275 = vmatpush1.msra.mxu0 %v223
    %276 = vmatprep.subr.mxu0 0.0
    %277 = vmatpush1.msra.mxu0 %v222
    %278 = vmatprep.subr.mxu0 0.0
    %279 = vmatpush2.msra.mxu0 0.0
    %280 = vmatprep.subr.mxu0 0.0
    %281 = vmatpush2.msra.mxu0 0.0
    %282 = vmatprep.subr.mxu0 0.0
    %283 = vmatpush2.msra.mxu0 0.0
    %284 = vmatprep.subr.mxu0 0.0
    %285 = vmatpush2.msra.mxu0 0.0
    %286 = vmatprep.subr.mxu0 0.0
    %287 = vmatpush2.msra.mxu0 0.0
    %288 = vmatprep.subr.mxu0 0.0
    %289 = vmatpush2.msra.mxu0 0.0
    %290 = vmatprep.subr.mxu0 0.0
    %291 = vmatpush2.msra.mxu0 0.0
    %292 = vmatprep.subr.mxu0 0.0
    %293 = vmatpush2.msra.mxu0 0.0
    %294 = vmatprep.subr.mxu0 0.0
    %295 = vmatpush2.msra.mxu0 0.0
    %296 = vmatprep.subr.mxu0 0.0
    %297 = vmatpush2.msra.mxu0 0.0
    %298 = vmatprep.subr.mxu0 0.0
    %299 = vmatpush2.msra.mxu0 0.0
    %300 = vmatprep.subr.mxu0 0.0
    %301 = vmatpush2.msra.mxu0 0.0
    %302 = vmatprep.subr.mxu0 0.0
    %303 = vmatpush2.msra.mxu0 0.0
    %304 = vmatprep.subr.mxu0 0.0
    %305 = vmatpush2.msra.mxu0 0.0
    %306 = vmatprep.subr.mxu0 0.0
    %307 = vmatpush2.msra.mxu0 0.0
    %308 = vmatprep.subr.mxu0 0.0
    %309 = vmatpush2.msra.mxu0 0.0
    %310 = vmatprep.mubr.f32.mxu0 0.0
    %311 = vmatmul.mubr.f32.gmra.mxu0 %v220
    %v312 = vpop.f32.mrf.mxu0
    %v313 = vadd.f32 %v244, %v312
    %v314 = vpop.f32.mrf.mxu0
    %315 = vdwg.mxu0
    %v316 = vmax.f32 %v313, 0.0
    %s317 = scalar_lea.vmem [#allocation2], 384
    %v318 = vld [vmem:[%s317] sm:$0xff]
    %v319 = vld [vmem:[%s317 + $0x8] sm:$0xff]
    %v320 = vld [vmem:[%s317 + $0x10] sm:$0xff]
    %v321 = vld [vmem:[%s317 + $0x18] sm:$0xff]
    %v322 = vld [vmem:[%s317 + $0x20] sm:$0xff]
    %v323 = vld [vmem:[%s317 + $0x28] sm:$0xff]
    %v324 = vld [vmem:[%s317 + $0x30] sm:$0xff]
    %v325 = vld [vmem:[%s317 + $0x38] sm:$0xff]
    %v326 = vld [vmem:[%s317 + $0x40] sm:$0xff]
    %v327 = vld [vmem:[%s317 + $0x48] sm:$0xff]
    %v328 = vld [vmem:[%s317 + $0x50] sm:$0xff]
    %v329 = vld [vmem:[%s317 + $0x58] sm:$0xff]
    %v330 = vld [vmem:[%s317 + $0x60] sm:$0xff]
    %v331 = vld [vmem:[%s317 + $0x68] sm:$0xff]
    %v332 = vld [vmem:[%s317 + $0x70] sm:$0xff]
    %v333 = vld [vmem:[%s317 + $0x78] sm:$0xff]
    %s334 = scalar_lea.vmem %s2, 3
    %v335 = vld [vmem:[%s334] sm:$0x1]
    %v337 = vlaneseq
    %v338 = vshrl.u32 %v337, 7
    %v339 = vsub.s32 0, %v338
    %v340 = vrot.slane %v335, %v339
    %342 = vmatprep.subr.mxu0 0.0
    %343 = vmatpush1.msra.mxu0 %v333
    %344 = vmatprep.subr.mxu0 0.0
    %345 = vmatpush1.msra.mxu0 %v332
    %346 = vmatprep.subr.mxu0 0.0
    %347 = vmatpush1.msra.mxu0 %v331
    %348 = vmatprep.subr.mxu0 0.0
    %349 = vmatpush1.msra.mxu0 %v330
    %350 = vmatprep.subr.mxu0 0.0
    %351 = vmatpush1.msra.mxu0 %v329
    %352 = vmatprep.subr.mxu0 0.0
    %353 = vmatpush1.msra.mxu0 %v328
    %354 = vmatprep.subr.mxu0 0.0
    %355 = vmatpush1.msra.mxu0 %v327
    %356 = vmatprep.subr.mxu0 0.0
    %357 = vmatpush1.msra.mxu0 %v326
    %358 = vmatprep.subr.mxu0 0.0
    %359 = vmatpush1.msra.mxu0 %v325
    %360 = vmatprep.subr.mxu0 0.0
    %361 = vmatpush1.msra.mxu0 %v324
    %362 = vmatprep.subr.mxu0 0.0
    %363 = vmatpush1.msra.mxu0 %v323
    %364 = vmatprep.subr.mxu0 0.0
    %365 = vmatpush1.msra.mxu0 %v322
    %366 = vmatprep.subr.mxu0 0.0
    %367 = vmatpush1.msra.mxu0 %v321
    %368 = vmatprep.subr.mxu0 0.0
    %369 = vmatpush1.msra.mxu0 %v320
    %370 = vmatprep.subr.mxu0 0.0
    %371 = vmatpush1.msra.mxu0 %v319
    %372 = vmatprep.subr.mxu0 0.0
    %373 = vmatpush1.msra.mxu0 %v318
    %374 = vmatprep.subr.mxu0 0.0
    %375 = vmatpush2.msra.mxu0 0.0
    %376 = vmatprep.subr.mxu0 0.0
    %377 = vmatpush2.msra.mxu0 0.0
    %378 = vmatprep.subr.mxu0 0.0
    %379 = vmatpush2.msra.mxu0 0.0
    %380 = vmatprep.subr.mxu0 0.0
    %381 = vmatpush2.msra.mxu0 0.0
    %382 = vmatprep.subr.mxu0 0.0
    %383 = vmatpush2.msra.mxu0 0.0
    %384 = vmatprep.subr.mxu0 0.0
    %385 = vmatpush2.msra.mxu0 0.0
    %386 = vmatprep.subr.mxu0 0.0
    %387 = vmatpush2.msra.mxu0 0.0
    %388 = vmatprep.subr.mxu0 0.0
    %389 = vmatpush2.msra.mxu0 0.0
    %390 = vmatprep.subr.mxu0 0.0
    %391 = vmatpush2.msra.mxu0 0.0
    %392 = vmatprep.subr.mxu0 0.0
    %393 = vmatpush2.msra.mxu0 0.0
    %394 = vmatprep.subr.mxu0 0.0
    %395 = vmatpush2.msra.mxu0 0.0
    %396 = vmatprep.subr.mxu0 0.0
    %397 = vmatpush2.msra.mxu0 0.0
    %398 = vmatprep.subr.mxu0 0.0
    %399 = vmatpush2.msra.mxu0 0.0
    %400 = vmatprep.subr.mxu0 0.0
    %401 = vmatpush2.msra.mxu0 0.0
    %402 = vmatprep.subr.mxu0 0.0
    %403 = vmatpush2.msra.mxu0 0.0
    %404 = vmatprep.subr.mxu0 0.0
    %405 = vmatpush2.msra.mxu0 0.0
    %406 = vmatprep.mubr.f32.mxu0 0.0
    %407 = vmatmul.mubr.f32.gmra.mxu0 %v316
    %v408 = vpop.f32.mrf.mxu0
    %v409 = vadd.f32 %v340, %v408
    %v410 = vpop.f32.mrf.mxu0
    %411 = vdwg.mxu0
    %v412 = vtanh.pop %v409
    %vm413 = vcmask 31744
    %414 = vst.msk [vmem:[%s3] sm:$0xff] %vm413, %v412
    // Predicated region
    $region18: #{dqn_forward.1} parent=1 // pred_check
      _
    $region19: #{dqn_forward.1} parent=1 // pred_check_branch
      %416 = sbr.rel (0) target = $region21
    $region20: #{dqn_forward.1} parent=1 // pred_region
      _
    $region21: #{dqn_forward.1} parent=1 // pred_fallthru
      _
    // Predicated region
    $region22: #{dqn_forward.1} parent=1 // pred_check
      _
    $region23: #{dqn_forward.1} parent=1 // pred_check_branch
      %418 = sbr.rel (0) target = $region25
    $region24: #{dqn_forward.1} parent=1 // pred_region
      _
    $region25: #{dqn_forward.1} parent=1 // pred_fallthru
      _
    %419 = vsyncpa [#allocation3], 1

</llo_original>
